<compile_context>
chip_gen: v7x
topology: tpu7x:2x2x1
jax: 0.10.0
libtpu: 0.0.40
codegen_flags: <defaults>
</compile_context>

<pallas_src>
import functools

import jax
import jax.numpy as jnp
from jax.experimental import pallas as pl
from jax.experimental.pallas import tpu as pltpu

LANE = 128          # vreg lane width
SUBLANE = 8         # f32 sublane count
BIAS_LANE = LANE - 1  # lane carrying the constant 1.0 for the bias trick


def rnn_seq_kernel(x_ref, h0_ref, w1_ref, w2_ref, out_ref, hid_ref, h_carry,
                   *, hidden_size, output_size):
    t = pl.program_id(0)

    @pl.when(t == 0)
    def _():
        h_carry[...] = h0_ref[...]

    # comb lanes: [hidden (0..H) | category | input | 0... | 1.0 at BIAS_LANE]
    # x slab has zeros in the hidden lanes; the carry has zeros everywhere else.
    comb = x_ref[0] + h_carry[...]

    # Fused i2h || i2o, biases folded into row BIAS_LANE of w1.
    # act1 = [hidden' (H) | i2o_out (O) | 0... | 1.0]  -- already the (padded)
    # concatenation o2o expects, with the bias-carry lane preserved.
    act1 = jnp.dot(comb, w1_ref[...], preferred_element_type=jnp.float32)

    col = jax.lax.broadcasted_iota(jnp.int32, act1.shape, 1)

    # New hidden = lanes [0, H) only; zero the rest before carrying so the
    # recurrence never ingests the i2o / bias lanes.
    new_h = jnp.where(col < hidden_size, act1, 0.0)
    h_carry[...] = new_h
    hid_ref[0] = new_h

    # o2o(cat(hidden', output)); b_o2o folded into row BIAS_LANE of w2.
    logits = jnp.dot(act1, w2_ref[...], preferred_element_type=jnp.float32)

    # Dropout(p=0.1): identity in eval mode (see TODO at top).

    # LogSoftmax over the real output lanes; padded lanes -> -inf so the
    # max / sum-exp reductions ignore them (exp(-inf) == 0).
    logits = jnp.where(col < output_size, logits, -jnp.inf)
    m = jnp.max(logits, axis=1, keepdims=True)
    shifted = logits - m
    lse = jnp.log(jnp.sum(jnp.exp(shifted), axis=1, keepdims=True))
    out_ref[0] = shifted - lse


def init_params(key, n_categories, input_size, hidden_size, output_size):
    """PyTorch-Linear-style init; weights stored as (in_features, out_features)."""
    def linear(k, fan_in, fan_out):
        kw, kb = jax.random.split(k)
        bound = 1.0 / jnp.sqrt(jnp.float32(fan_in))
        w = jax.random.uniform(kw, (fan_in, fan_out), jnp.float32, -bound, bound)
        b = jax.random.uniform(kb, (1, fan_out), jnp.float32, -bound, bound)
        return w, b

    k1, k2, k3 = jax.random.split(key, 3)
    comb = n_categories + input_size + hidden_size
    w_i2h, b_i2h = linear(k1, comb, hidden_size)
    w_i2o, b_i2o = linear(k2, comb, output_size)
    w_o2o, b_o2o = linear(k3, hidden_size + output_size, output_size)
    return dict(w_i2h=w_i2h, b_i2h=b_i2h,
                w_i2o=w_i2o, b_i2o=b_i2o,
                w_o2o=w_o2o, b_o2o=b_o2o)


def pack_params(params, n_categories, input_size, hidden_size, output_size):
    """Fuse i2h/i2o into one lane-padded weight, fold biases (bias trick).

    Row layout of w1 matches the kernel's comb lanes: [hidden | cat | inp],
    then the bias row at BIAS_LANE.  Column layout: [i2h out | i2o out],
    plus w1[BIAS_LANE, BIAS_LANE] = 1 so act1 keeps a 1.0 in its bias lane.
    """
    C, I, H, O = n_categories, input_size, hidden_size, output_size
    assert C + I + H <= BIAS_LANE and H + O <= BIAS_LANE and O <= BIAS_LANE

    w_i2h, w_i2o = params["w_i2h"], params["w_i2o"]   # rows ordered [cat|inp|hid]

    w1 = jnp.zeros((LANE, LANE), jnp.float32)
    # hidden rows first (kernel lane layout), then category, then input.
    w1 = w1.at[0:H, 0:H].set(w_i2h[C + I:, :])
    w1 = w1.at[H:H + C, 0:H].set(w_i2h[0:C, :])
    w1 = w1.at[H + C:H + C + I, 0:H].set(w_i2h[C:C + I, :])
    w1 = w1.at[0:H, H:H + O].set(w_i2o[C + I:, :])
    w1 = w1.at[H:H + C, H:H + O].set(w_i2o[0:C, :])
    w1 = w1.at[H + C:H + C + I, H:H + O].set(w_i2o[C:C + I, :])
    # folded biases + bias-carry column.
    w1 = w1.at[BIAS_LANE, 0:H].set(params["b_i2h"][0])
    w1 = w1.at[BIAS_LANE, H:H + O].set(params["b_i2o"][0])
    w1 = w1.at[BIAS_LANE, BIAS_LANE].set(1.0)

    w2 = jnp.zeros((LANE, LANE), jnp.float32)
    w2 = w2.at[0:H + O, 0:O].set(params["w_o2o"])
    w2 = w2.at[BIAS_LANE, 0:O].set(params["b_o2o"][0])
    return dict(w1=w1, w2=w2)


@functools.partial(jax.jit, static_argnames=("hidden_size", "output_size"))
def rnn_sequence(category_seq, input_seq, hidden0, w1, w2,
                 *, hidden_size, output_size):
    """Run the RNN cell over T steps in a single pallas_call.

    category_seq: (T, B, C), input_seq: (T, B, I), hidden0: (B, H).
    Returns per-step log-probs (T, B, O) and hiddens (T, B, H).
    """
    T, B, C = category_seq.shape
    I = input_seq.shape[2]
    H, O = hidden_size, output_size
    B_pad = max(SUBLANE, pl.cdiv(B, SUBLANE) * SUBLANE)

    # Pack the whole sequence once (no per-step concat/pad on the critical
    # path): lanes [H, H+C)=category, [H+C, H+C+I)=input, hidden lanes left
    # zero (injected from the VMEM carry), lane BIAS_LANE = 1.0 (bias trick).
    x = jnp.zeros((T, B_pad, LANE), jnp.float32)
    x = x.at[:, :B, H:H + C].set(category_seq.astype(jnp.float32))
    x = x.at[:, :B, H + C:H + C + I].set(input_seq.astype(jnp.float32))
    x = x.at[:, :, BIAS_LANE].set(1.0)
    h0 = jnp.zeros((B_pad, LANE), jnp.float32).at[:B, :H].set(
        hidden0.astype(jnp.float32))

    cost = pl.CostEstimate(
        flops=4 * T * B_pad * LANE * LANE,                       # 2 matmuls/step
        transcendentals=T * B_pad * (LANE + 1),                  # exp + log
        bytes_accessed=4 * (3 * T * B_pad * LANE + B_pad * LANE + 2 * LANE * LANE),
    )

    out_pad, hid_pad = pl.pallas_call(
        functools.partial(rnn_seq_kernel, hidden_size=H, output_size=O),
        out_shape=(jax.ShapeDtypeStruct((T, B_pad, LANE), jnp.float32),
                   jax.ShapeDtypeStruct((T, B_pad, LANE), jnp.float32)),
        grid_spec=pltpu.PrefetchScalarGridSpec(
            num_scalar_prefetch=0,
            grid=(T,),
            in_specs=[
                pl.BlockSpec((1, B_pad, LANE), lambda t: (t, 0, 0)),  # streamed
                pl.BlockSpec((B_pad, LANE), lambda t: (0, 0)),        # h0 resident
                pl.BlockSpec((LANE, LANE), lambda t: (0, 0)),         # w1 resident
                pl.BlockSpec((LANE, LANE), lambda t: (0, 0)),         # w2 resident
            ],
            out_specs=(
                pl.BlockSpec((1, B_pad, LANE), lambda t: (t, 0, 0)),
                pl.BlockSpec((1, B_pad, LANE), lambda t: (t, 0, 0)),
            ),
            scratch_shapes=[pltpu.VMEM((B_pad, LANE), jnp.float32)],  # hidden carry
        ),
        compiler_params=pltpu.CompilerParams(
            dimension_semantics=("arbitrary",)),   # recurrent axis
        cost_estimate=cost,
    )(x, h0, w1, w2)

    return out_pad[:, :B, :O], hid_pad[:, :B, :H]


def rnn_forward(category, inp, hidden, packed, *, hidden_size, output_size):
    """Single-step forward matching the PyTorch module exactly (T=1)."""
    out, hid = rnn_sequence(category[None], inp[None], hidden,
                            packed["w1"], packed["w2"],
                            hidden_size=hidden_size, output_size=output_size)
    return out[0], hid[0]


def rnn_step_ref(category, inp, hidden, params):
    """Pure-JAX reference matching the PyTorch module (eval mode)."""
    combined = jnp.concatenate([category, inp, hidden], axis=1)
    h = combined @ params["w_i2h"] + params["b_i2h"]
    o = combined @ params["w_i2o"] + params["b_i2o"]
    o2 = jnp.concatenate([h, o], axis=1) @ params["w_o2o"] + params["b_o2o"]
    return jax.nn.log_softmax(o2, axis=1), h


if __name__ == "__main__":
    n_categories = 8
    input_size = 16
    hidden_size = 32
    output_size = 16
    batch = 2
    seq_len = 8

    key = jax.random.PRNGKey(0)
    kp, kc, ki, kh = jax.random.split(key, 4)

    params = init_params(kp, n_categories, input_size, hidden_size, output_size)
    packed = pack_params(params, n_categories, input_size, hidden_size, output_size)

    category_seq = jax.random.normal(kc, (seq_len, batch, n_categories), jnp.float32)
    input_seq = jax.random.normal(ki, (seq_len, batch, input_size), jnp.float32)
    hidden0 = jax.random.normal(kh, (batch, hidden_size), jnp.float32)

    # Fused T-step kernel (weights resident, hidden carried in VMEM).
    out_seq, hid_seq = rnn_sequence(category_seq, input_seq, hidden0,
                                    packed["w1"], packed["w2"],
                                    hidden_size=hidden_size,
                                    output_size=output_size)
    out_seq = jax.block_until_ready(out_seq)
    hid_seq = jax.block_until_ready(hid_seq)
    assert out_seq.shape == (seq_len, batch, output_size)
    assert hid_seq.shape == (seq_len, batch, hidden_size)

    # Reference: iterate the module's single-step forward.
    h = hidden0
    for t in range(seq_len):
        ref_out, h = rnn_step_ref(category_seq[t], input_seq[t], h, params)
        assert jnp.allclose(out_seq[t], ref_out, atol=1e-4, rtol=1e-5), f"out mismatch @ {t}"
        assert jnp.allclose(hid_seq[t], h, atol=1e-4, rtol=1e-5), f"hidden mismatch @ {t}"

    # Single-step path (the module's forward) check as well.
    out1, h1 = rnn_forward(category_seq[0], input_seq[0], hidden0, packed,
                           hidden_size=hidden_size, output_size=output_size)
    out1 = jax.block_until_ready(out1)
    ref_out1, ref_h1 = rnn_step_ref(category_seq[0], input_seq[0], hidden0, params)
    assert jnp.allclose(out1, ref_out1, atol=1e-4, rtol=1e-5)
    assert jnp.allclose(h1, ref_h1, atol=1e-4, rtol=1e-5)

    print("KERNEL_OK")
</pallas_src>

<mosaic_0001>
module attributes {stable_mosaic.version = 11 : i64} {
  func.func @rnn_seq_kernel(%arg0: i32, %arg1: memref<1x8x128xf32, #tpu.memory_space<vmem>>, %arg2: memref<8x128xf32, #tpu.memory_space<vmem>>, %arg3: memref<128x128xf32, #tpu.memory_space<vmem>>, %arg4: memref<128x128xf32, #tpu.memory_space<vmem>>, %arg5: memref<1x8x128xf32, #tpu.memory_space<vmem>>, %arg6: memref<1x8x128xf32, #tpu.memory_space<vmem>>, %arg7: memref<8x128xf32, #tpu.memory_space<vmem>>) attributes {dimension_semantics = [#tpu.dimension_semantics<arbitrary>], iteration_bounds = array<i64: 8>, scalar_prefetch = 0 : i64, scratch_operands = 1 : i64, tpu.core_type = #tpu.core_type<tc>, window_params = [{transform_indices = @transform_0, window_bounds = array<i64: 1, 8, 128>}, {pipeline_mode = #tpu.pipeline_mode<synchronous>, transform_indices = @transform_1, window_bounds = array<i64: 8, 128>}, {pipeline_mode = #tpu.pipeline_mode<synchronous>, transform_indices = @transform_2, window_bounds = array<i64: 128, 128>}, {pipeline_mode = #tpu.pipeline_mode<synchronous>, transform_indices = @transform_3, window_bounds = array<i64: 128, 128>}, {transform_indices = @transform_4, window_bounds = array<i64: 1, 8, 128>}, {transform_indices = @transform_5, window_bounds = array<i64: 1, 8, 128>}]} {
    %c0_i32 = arith.constant 0 : i32
    %0 = arith.cmpi eq, %arg0, %c0_i32 : i32
    %1 = arith.extui %0 : i1 to i32
    %c0_i32_0 = arith.constant 0 : i32
    %2 = arith.cmpi ne, %1, %c0_i32_0 : i32
    scf.if %2 {
      %c0_22 = arith.constant 0 : index
      %c0_23 = arith.constant 0 : index
      %37 = vector.load %arg2[%c0_22, %c0_23] : memref<8x128xf32, #tpu.memory_space<vmem>>, vector<8x128xf32>
      %c0_24 = arith.constant 0 : index
      %c0_25 = arith.constant 0 : index
      %38 = vector.load %arg7[%c0_24, %c0_25] : memref<8x128xf32, #tpu.memory_space<vmem>>, vector<8x128xf32>
      tpu.vector_store %arg7[%c0_24, %c0_25], %37 {strides = array<i32>} : memref<8x128xf32, #tpu.memory_space<vmem>>, vector<8x128xf32>,
    } else {
    }
    %c0 = arith.constant 0 : index
    %c0_1 = arith.constant 0 : index
    %c0_2 = arith.constant 0 : index
    %3 = vector.load %arg1[%c0, %c0_1, %c0_2] : memref<1x8x128xf32, #tpu.memory_space<vmem>>, vector<1x8x128xf32>
    %4 = vector.shape_cast %3 : vector<1x8x128xf32> to vector<8x128xf32>
    %c0_3 = arith.constant 0 : index
    %c0_4 = arith.constant 0 : index
    %5 = vector.load %arg7[%c0_3, %c0_4] : memref<8x128xf32, #tpu.memory_space<vmem>>, vector<8x128xf32>
    %6 = arith.addf %4, %5 : vector<8x128xf32>
    %c0_5 = arith.constant 0 : index
    %c0_6 = arith.constant 0 : index
    %7 = vector.load %arg3[%c0_5, %c0_6] : memref<128x128xf32, #tpu.memory_space<vmem>>, vector<128x128xf32>
    %cst = arith.constant dense<0.000000e+00> : vector<8x128xf32>
    %8 = tpu.matmul %6, %7, %cst {dimension_numbers = #tpu.dot_dimension_numbers<[1], [0], [0], [1], [0, 0, 1, 1], [], []>} : vector<8x128xf32>, vector<128x128xf32>, vector<8x128xf32> -> vector<8x128xf32>
    %9 = tpu.iota {dimensions = array<i32: 1>} : vector<8x128xi32>
    %c32_i32 = arith.constant 32 : i32
    %10 = vector.broadcast %c32_i32 : i32 to vector<8x128xi32>
    %11 = arith.cmpi slt, %9, %10 : vector<8x128xi32>
    %cst_7 = arith.constant 0.000000e+00 : f32
    %12 = vector.broadcast %cst_7 : f32 to vector<8x128xf32>
    %13 = arith.select %11, %8, %12 : vector<8x128xi1>, vector<8x128xf32>
    %c0_8 = arith.constant 0 : index
    %c0_9 = arith.constant 0 : index
    %14 = vector.load %arg7[%c0_8, %c0_9] : memref<8x128xf32, #tpu.memory_space<vmem>>, vector<8x128xf32>
    tpu.vector_store %arg7[%c0_8, %c0_9], %13 {strides = array<i32>} : memref<8x128xf32, #tpu.memory_space<vmem>>, vector<8x128xf32>,
    %c0_10 = arith.constant 0 : index
    %c0_11 = arith.constant 0 : index
    %c0_12 = arith.constant 0 : index
    %15 = vector.load %arg6[%c0_10, %c0_11, %c0_12] : memref<1x8x128xf32, #tpu.memory_space<vmem>>, vector<1x8x128xf32>
    %16 = vector.shape_cast %15 : vector<1x8x128xf32> to vector<8x128xf32>
    %17 = vector.shape_cast %13 : vector<8x128xf32> to vector<1x8x128xf32>
    tpu.vector_store %arg6[%c0_10, %c0_11, %c0_12], %17 {strides = array<i32>} : memref<1x8x128xf32, #tpu.memory_space<vmem>>, vector<1x8x128xf32>,
    %c0_13 = arith.constant 0 : index
    %c0_14 = arith.constant 0 : index
    %18 = vector.load %arg4[%c0_13, %c0_14] : memref<128x128xf32, #tpu.memory_space<vmem>>, vector<128x128xf32>
    %cst_15 = arith.constant dense<0.000000e+00> : vector<8x128xf32>
    %19 = tpu.matmul %8, %18, %cst_15 {dimension_numbers = #tpu.dot_dimension_numbers<[1], [0], [0], [1], [0, 0, 1, 1], [], []>} : vector<8x128xf32>, vector<128x128xf32>, vector<8x128xf32> -> vector<8x128xf32>
    %c16_i32 = arith.constant 16 : i32
    %20 = vector.broadcast %c16_i32 : i32 to vector<8x128xi32>
    %21 = arith.cmpi slt, %9, %20 : vector<8x128xi32>
    %cst_16 = arith.constant 0xFF800000 : f32
    %22 = vector.broadcast %cst_16 : f32 to vector<8x128xf32>
    %23 = arith.select %21, %19, %22 : vector<8x128xi1>, vector<8x128xf32>
    %cst_17 = arith.constant dense<0xFF800000> : vector<8xf32>
    %24 = vector.multi_reduction <maximumf>, %23, %cst_17 [1] : vector<8x128xf32> to vector<8xf32>
    %25 = vector.shape_cast %24 : vector<8xf32> to vector<8x1xf32>
    %26 = vector.broadcast %25 : vector<8x1xf32> to vector<8x128xf32>
    %27 = arith.subf %23, %26 : vector<8x128xf32>
    %28 = math.exp %27 : vector<8x128xf32>
    %cst_18 = arith.constant dense<0.000000e+00> : vector<8xf32>
    %29 = vector.multi_reduction <add>, %28, %cst_18 [1] : vector<8x128xf32> to vector<8xf32>
    %30 = vector.shape_cast %29 : vector<8xf32> to vector<8x1xf32>
    %31 = math.log %30 : vector<8x1xf32>
    %32 = vector.broadcast %31 : vector<8x1xf32> to vector<8x128xf32>
    %33 = arith.subf %27, %32 : vector<8x128xf32>
    %c0_19 = arith.constant 0 : index
    %c0_20 = arith.constant 0 : index
    %c0_21 = arith.constant 0 : index
    %34 = vector.load %arg5[%c0_19, %c0_20, %c0_21] : memref<1x8x128xf32, #tpu.memory_space<vmem>>, vector<1x8x128xf32>
    %35 = vector.shape_cast %34 : vector<1x8x128xf32> to vector<8x128xf32>
    %36 = vector.shape_cast %33 : vector<8x128xf32> to vector<1x8x128xf32>
    tpu.vector_store %arg5[%c0_19, %c0_20, %c0_21], %36 {strides = array<i32>} : memref<1x8x128xf32, #tpu.memory_space<vmem>>, vector<1x8x128xf32>,
    return
  }
  func.func @transform_0(%arg0: i32) -> (i32, i32, i32) {
    %c0_i32 = arith.constant 0 : i32
    %c0_i32_0 = arith.constant 0 : i32
    %c0_i32_1 = arith.constant 0 : i32
    return %arg0, %c0_i32, %c0_i32_0 : i32, i32, i32
  }
  func.func @transform_1(%arg0: i32) -> (i32, i32) {
    %c0_i32 = arith.constant 0 : i32
    %c0_i32_0 = arith.constant 0 : i32
    %c0_i32_1 = arith.constant 0 : i32
    return %c0_i32, %c0_i32_0 : i32, i32
  }
  func.func @transform_2(%arg0: i32) -> (i32, i32) {
    %c0_i32 = arith.constant 0 : i32
    %c0_i32_0 = arith.constant 0 : i32
    %c0_i32_1 = arith.constant 0 : i32
    return %c0_i32, %c0_i32_0 : i32, i32
  }
  func.func @transform_3(%arg0: i32) -> (i32, i32) {
    %c0_i32 = arith.constant 0 : i32
    %c0_i32_0 = arith.constant 0 : i32
    %c0_i32_1 = arith.constant 0 : i32
    return %c0_i32, %c0_i32_0 : i32, i32
  }
  func.func @transform_4(%arg0: i32) -> (i32, i32, i32) {
    %c0_i32 = arith.constant 0 : i32
    %c0_i32_0 = arith.constant 0 : i32
    %c0_i32_1 = arith.constant 0 : i32
    return %arg0, %c0_i32, %c0_i32_0 : i32, i32, i32
  }
  func.func @transform_5(%arg0: i32) -> (i32, i32, i32) {
    %c0_i32 = arith.constant 0 : i32
    %c0_i32_0 = arith.constant 0 : i32
    %c0_i32_1 = arith.constant 0 : i32
    return %arg0, %c0_i32, %c0_i32_0 : i32, i32, i32
  }
}

</mosaic_0001>

<llo_original>
// kernel: rnn_sequence.1
$region0: #{rnn_sequence.1}
  #allocation0 [shape = 'u32[]', space=smem, size = 0x4, offset = 0x4, fixed_abs, tag = 'smem constant byte address 0x4 - core index']
  #allocation1 [shape = 'u32[144,128]{1,0:T(1,128)}', space=vmem, size = 0x12000, scoped, tag = 'internal scratch']
  #allocation2 [shape = 'f32[8,128]{1,0:T(8,128)}', space=vmem, size = 0x1000, scoped, tag = 'scratch operand']
  %s0 = inlined_call_operand.vmem [shape: f32[8,8,128], index: 0, kind: input, shape index: {}]
  %s1 = inlined_call_operand.vmem [shape: f32[8,128], index: 1, kind: input, shape index: {}]
  %s2 = inlined_call_operand.vmem [shape: f32[128,128], index: 2, kind: input, shape index: {}]
  %s3 = inlined_call_operand.vmem [shape: f32[128,128], index: 3, kind: input, shape index: {}]
  %s4 = inlined_call_operand.vmem [shape: f32[8,8,128], index: 4, kind: output, shape index: {0}]
  %s5 = inlined_call_operand.vmem [shape: f32[8,8,128], index: 5, kind: output, shape index: {1}]
  %6 = xla_tuple %s4, %s5
  %s7 = sld [smem:[#allocation0]]
  $region61: #{rnn_sequence.1} parent=0
    _
  %s9 = ssub.s32 1, %s7
  %s10 = scalar_select 0, %s9, %s7
  loop: start=0, step=1, limit=10
  $region2: #{rnn_sequence.1} parent=0 // loop_pre_header
    _
  $region3: #{rnn_sequence.1} parent=0 // loop_header
    %s12 = sphi 0, %s16
    %p13 = scmp.ge.s32.totalorder %s12, 10
    %s22 = sphi 0, %s24
    %s25 = sphi 0, %s22
    %s26 = sphi 0, %s25
    %s42 = sphi 0, %s26
    %s46 = sphi 0, %s46
    %s48 = sphi 0, %s46
    %s49 = sphi 0, %s48
    %s63 = sphi 0, %s49
    %s67 = sphi 0, %s67
    %s69 = sphi 0, %s67
    %s70 = sphi 0, %s69
    %s84 = sphi 0, %s70
    %s88 = sphi 0, %s88
    %s90 = sphi 0, %s88
    %s91 = sphi 0, %s90
    %s105 = sphi 0, %s91
    %s111 = sphi 0, %s113
    %s114 = sphi 0, %s111
    %s115 = sphi 0, %s114
    %s131 = sphi 0, %s115
    %s137 = sphi 0, %s139
    %s140 = sphi 0, %s137
    %s141 = sphi 0, %s140
    %s157 = sphi 0, %s141
  $region4: #{rnn_sequence.1} parent=0 // loop_header_branch
    %15 = sbr.rel (%p13) target = $region8
  $region5: #{rnn_sequence.1} parent=0 // loop_body
    %s17 = ssub.s32 %s12, 1
    %s18 = ssub.s32 %s12, 2
    %s19 = sadd.s32 %s12, 1
    %s20 = ssub.s32 %s12, %s19
    %p21 = scmp.eq.s32.totalorder %s20, 0
    %s23 = sadd.s32 %s22, 1
    %s24 = scalar_select %p21, %s22, %s23
    %p27 = pneg %p21
    %p28 = scmp.eq.s32.totalorder %s12, 7
    %p29 = por %p27, %p28
    %p30 = scmp.ne.s32.totalorder %s22, %s25
    %p31 = scmp.eq.s32.totalorder %s12, 0
    %p32 = por %p30, %p31
    %p33 = scmp.ne.s32.totalorder %s22, %s25
    %p34 = scmp.eq.s32.totalorder %s17, 7
    %p35 = por %p33, %p34
    %p36 = scmp.ne.s32.totalorder %s25, %s26
    %p37 = scmp.eq.s32.totalorder %s17, 0
    %p38 = por %p36, %p37
    %p39 = scmp.ne.s32.totalorder %s25, %s26
    %p40 = scmp.eq.s32.totalorder %s18, 7
    %p41 = por %p39, %p40
    %p43 = scmp.ne.s32.totalorder %s26, %s42
    %p44 = scmp.eq.s32.totalorder %s18, 0
    %p45 = por %p43, %p44
    %s47 = sadd.s32 %s46, 1
    %p50 = scmp.eq.s32.totalorder %s12, 7
    %p51 = scmp.ne.s32.totalorder %s46, %s48
    %p52 = scmp.eq.s32.totalorder %s12, 0
    %p53 = por %p51, %p52
    %p54 = scmp.ne.s32.totalorder %s46, %s48
    %p55 = scmp.eq.s32.totalorder %s17, 7
    %p56 = por %p54, %p55
    %p57 = scmp.ne.s32.totalorder %s48, %s49
    %p58 = scmp.eq.s32.totalorder %s17, 0
    %p59 = por %p57, %p58
    %p60 = scmp.ne.s32.totalorder %s48, %s49
    %p61 = scmp.eq.s32.totalorder %s18, 7
    %p62 = por %p60, %p61
    %p64 = scmp.ne.s32.totalorder %s49, %s63
    %p65 = scmp.eq.s32.totalorder %s18, 0
    %p66 = por %p64, %p65
    %s68 = sadd.s32 %s67, 1
    %p71 = scmp.eq.s32.totalorder %s12, 7
    %p72 = scmp.ne.s32.totalorder %s67, %s69
    %p73 = scmp.eq.s32.totalorder %s12, 0
    %p74 = por %p72, %p73
    %p75 = scmp.ne.s32.totalorder %s67, %s69
    %p76 = scmp.eq.s32.totalorder %s17, 7
    %p77 = por %p75, %p76
    %p78 = scmp.ne.s32.totalorder %s69, %s70
    %p79 = scmp.eq.s32.totalorder %s17, 0
    %p80 = por %p78, %p79
    %p81 = scmp.ne.s32.totalorder %s69, %s70
    %p82 = scmp.eq.s32.totalorder %s18, 7
    %p83 = por %p81, %p82
    %p85 = scmp.ne.s32.totalorder %s70, %s84
    %p86 = scmp.eq.s32.totalorder %s18, 0
    %p87 = por %p85, %p86
    %s89 = sadd.s32 %s88, 1
    %p92 = scmp.eq.s32.totalorder %s12, 7
    %p93 = scmp.ne.s32.totalorder %s88, %s90
    %p94 = scmp.eq.s32.totalorder %s12, 0
    %p95 = por %p93, %p94
    %p96 = scmp.ne.s32.totalorder %s88, %s90
    %p97 = scmp.eq.s32.totalorder %s17, 7
    %p98 = por %p96, %p97
    %p99 = scmp.ne.s32.totalorder %s90, %s91
    %p100 = scmp.eq.s32.totalorder %s17, 0
    %p101 = por %p99, %p100
    %p102 = scmp.ne.s32.totalorder %s90, %s91
    %p103 = scmp.eq.s32.totalorder %s18, 7
    %p104 = por %p102, %p103
    %p106 = scmp.ne.s32.totalorder %s91, %s105
    %p107 = scmp.eq.s32.totalorder %s18, 0
    %p108 = por %p106, %p107
    %s109 = ssub.s32 %s12, %s19
    %p110 = scmp.eq.s32.totalorder %s109, 0
    %s112 = sadd.s32 %s111, 1
    %s113 = scalar_select %p110, %s111, %s112
    %p116 = pneg %p110
    %p117 = scmp.eq.s32.totalorder %s12, 7
    %p118 = por %p116, %p117
    %p119 = scmp.ne.s32.totalorder %s111, %s114
    %p120 = scmp.eq.s32.totalorder %s12, 0
    %p121 = por %p119, %p120
    %p122 = scmp.ne.s32.totalorder %s111, %s114
    %p123 = scmp.eq.s32.totalorder %s17, 7
    %p124 = por %p122, %p123
    %p125 = scmp.ne.s32.totalorder %s114, %s115
    %p126 = scmp.eq.s32.totalorder %s17, 0
    %p127 = por %p125, %p126
    %p128 = scmp.ne.s32.totalorder %s114, %s115
    %p129 = scmp.eq.s32.totalorder %s18, 7
    %p130 = por %p128, %p129
    %p132 = scmp.ne.s32.totalorder %s115, %s131
    %p133 = scmp.eq.s32.totalorder %s18, 0
    %p134 = por %p132, %p133
    %s135 = ssub.s32 %s12, %s19
    %p136 = scmp.eq.s32.totalorder %s135, 0
    %s138 = sadd.s32 %s137, 1
    %s139 = scalar_select %p136, %s137, %s138
    %p142 = pneg %p136
    %p143 = scmp.eq.s32.totalorder %s12, 7
    %p144 = por %p142, %p143
    %p145 = scmp.ne.s32.totalorder %s137, %s140
    %p146 = scmp.eq.s32.totalorder %s12, 0
    %p147 = por %p145, %p146
    %p148 = scmp.ne.s32.totalorder %s137, %s140
    %p149 = scmp.eq.s32.totalorder %s17, 7
    %p150 = por %p148, %p149
    %p151 = scmp.ne.s32.totalorder %s140, %s141
    %p152 = scmp.eq.s32.totalorder %s17, 0
    %p153 = por %p151, %p152
    %p154 = scmp.ne.s32.totalorder %s140, %s141
    %p155 = scmp.eq.s32.totalorder %s18, 7
    %p156 = por %p154, %p155
    %p158 = scmp.ne.s32.totalorder %s141, %s157
    %p159 = scmp.eq.s32.totalorder %s18, 0
    %p160 = por %p158, %p159
    %p161 = scmp.le.s32.totalorder 1, %s12
    %p162 = scmp.lt.s32.totalorder %s12, 9
    %p163 = pnand %p161, %p162
    %p164 = pneg %p163
    // Predicated region
    $region9: #{rnn_sequence.1} parent=5 // pred_check
      _
    $region10: #{rnn_sequence.1} parent=5 // pred_check_branch
      %166 = sbr.rel (%p163) target = $region12
    $region11: #{rnn_sequence.1} parent=5 // pred_region
      %s167 = ssub.s32 %s12, 1
      // Predicated region
      $region13: #{rnn_sequence.1} parent=11 // pred_check
        %p168 = pneg %p59
      $region14: #{rnn_sequence.1} parent=11 // pred_check_branch
        %170 = sbr.rel (%p168) target = $region16
      $region15: #{rnn_sequence.1} parent=11 // pred_region
        _
      $region16: #{rnn_sequence.1} parent=11 // pred_fallthru
        _
      // Predicated region
      $region17: #{rnn_sequence.1} parent=11 // pred_check
        %p171 = pneg %p80
      $region18: #{rnn_sequence.1} parent=11 // pred_check_branch
        %173 = sbr.rel (%p171) target = $region20
      $region19: #{rnn_sequence.1} parent=11 // pred_region
        _
      $region20: #{rnn_sequence.1} parent=11 // pred_fallthru
        _
      // Predicated region
      $region21: #{rnn_sequence.1} parent=11 // pred_check
        %p174 = pneg %p101
      $region22: #{rnn_sequence.1} parent=11 // pred_check_branch
        %176 = sbr.rel (%p174) target = $region24
      $region23: #{rnn_sequence.1} parent=11 // pred_region
        _
      $region24: #{rnn_sequence.1} parent=11 // pred_fallthru
        _
    $region12: #{rnn_sequence.1} parent=5 // pred_fallthru
      _
    %p177 = scmp.lt.s32.totalorder %s12, 8
    // Predicated region
    $region25: #{rnn_sequence.1} parent=5 // pred_check
      %p178 = pneg %p177
    $region26: #{rnn_sequence.1} parent=5 // pred_check_branch
      %180 = sbr.rel (%p178) target = $region28
    $region27: #{rnn_sequence.1} parent=5 // pred_region
      // Predicated region
      $region29: #{rnn_sequence.1} parent=27 // pred_check
        %p181 = pneg %p32
      $region30: #{rnn_sequence.1} parent=27 // pred_check_branch
        %183 = sbr.rel (%p181) target = $region32
      $region31: #{rnn_sequence.1} parent=27 // pred_region
        %p184 = scmp.lt.s32.totalorder %s12, 7
        %s185 = scalar_select %p184, %s12, 7
        %s186 = smul.addr %s185, 8
        %s187 = scalar_lea.vmem %s0, %s186
      $region32: #{rnn_sequence.1} parent=27 // pred_fallthru
        _
    $region28: #{rnn_sequence.1} parent=5 // pred_fallthru
      _
    %p188 = scmp.le.s32.totalorder 1, %s12
    %p189 = scmp.lt.s32.totalorder %s12, 9
    %p190 = pnand %p188, %p189
    %p191 = pneg %p190
    // Predicated region
    $region33: #{rnn_sequence.1} parent=5 // pred_check
      _
    $region34: #{rnn_sequence.1} parent=5 // pred_check_branch
      %193 = sbr.rel (%p190) target = $region36
    $region35: #{rnn_sequence.1} parent=5 // pred_region
      %s194 = ssub.s32 %s12, 1
      %p195 = scmp.lt.s32.totalorder %s17, 7
      %s196 = scalar_select %p195, %s17, 7
      %s197 = smul.addr %s196, 8
      %s198 = scalar_lea.vmem %s0, %s197
      %p199 = pneg %p38
      %p200 = pneg %p35
      %p201 = pneg %p59
      %p202 = pneg %p56
      %p203 = pneg %p80
      %p204 = pneg %p77
      %p205 = pneg %p101
      %p206 = pneg %p98
      %p207 = pneg %p127
      %p208 = pneg %p124
      %p209 = scmp.lt.s32.totalorder %s17, 7
      %s210 = scalar_select %p209, %s17, 7
      %s211 = smul.addr %s210, 8
      %s212 = scalar_lea.vmem %s4, %s211
      %p213 = pneg %p153
      %p214 = pneg %p150
      %p215 = scmp.lt.s32.totalorder %s17, 7
      %s216 = scalar_select %p215, %s17, 7
      %s217 = smul.addr %s216, 8
      %s218 = scalar_lea.vmem %s5, %s217
      %p219 = scmp.lt.s32.totalorder %s17, 7
      %s220 = scalar_select %p219, %s17, 7
      %s221 = smul.addr %s220, 8
      %s222 = scalar_lea.vmem %s0, %s221
      %p223 = scmp.lt.s32.totalorder %s17, 7
      %s224 = scalar_select %p223, %s17, 7
      %s225 = smul.addr %s224, 8
      %s226 = scalar_lea.vmem %s4, %s225
      %p227 = scmp.lt.s32.totalorder %s17, 7
      %s228 = scalar_select %p227, %s17, 7
      %s229 = smul.addr %s228, 8
      %s230 = scalar_lea.vmem %s5, %s229
      %p231 = scmp.eq.s32.totalorder %s17, 0
      // Predicated region
      $region37: #{rnn_sequence.1} parent=35 // pred_check
        %p232 = pneg %p231
      $region38: #{rnn_sequence.1} parent=35 // pred_check_branch
        %234 = sbr.rel (%p232) target = $region40
      $region39: #{rnn_sequence.1} parent=35 // pred_region
        %v235 = vld [vmem:[%s1] sm:$0xff]
        %236 = vst [vmem:[#allocation2] sm:$0xff] %v235
      $region40: #{rnn_sequence.1} parent=35 // pred_fallthru
        _
      %v237 = vld [vmem:[%s222] sm:$0xff]
      %v238 = vld [vmem:[#allocation2] sm:$0xff]
      %v239 = vadd.f32 %v237, %v238
      %v240 = vld [vmem:[%s2] sm:$0xff]
      %v241 = vld [vmem:[%s2 + $0x8] sm:$0xff]
      %v242 = vld [vmem:[%s2 + $0x10] sm:$0xff]
      %v243 = vld [vmem:[%s2 + $0x18] sm:$0xff]
      %v244 = vld [vmem:[%s2 + $0x20] sm:$0xff]
      %v245 = vld [vmem:[%s2 + $0x28] sm:$0xff]
      %v246 = vld [vmem:[%s2 + $0x30] sm:$0xff]
      %v247 = vld [vmem:[%s2 + $0x38] sm:$0xff]
      %v248 = vld [vmem:[%s2 + $0x40] sm:$0xff]
      %v249 = vld [vmem:[%s2 + $0x48] sm:$0xff]
      %v250 = vld [vmem:[%s2 + $0x50] sm:$0xff]
      %v251 = vld [vmem:[%s2 + $0x58] sm:$0xff]
      %v252 = vld [vmem:[%s2 + $0x60] sm:$0xff]
      %v253 = vld [vmem:[%s2 + $0x68] sm:$0xff]
      %v254 = vld [vmem:[%s2 + $0x70] sm:$0xff]
      %v255 = vld [vmem:[%s2 + $0x78] sm:$0xff]
      %256 = vmatprep.subr.mxu0 0.0
      %257 = vmatpush1.msra.mxu0 %v240
      %258 = vmatprep.subr.mxu0 0.0
      %259 = vmatpush1.msra.mxu0 %v241
      %260 = vmatprep.subr.mxu0 0.0
      %261 = vmatpush1.msra.mxu0 %v242
      %262 = vmatprep.subr.mxu0 0.0
      %263 = vmatpush1.msra.mxu0 %v243
      %264 = vmatprep.subr.mxu0 0.0
      %265 = vmatpush1.msra.mxu0 %v244
      %266 = vmatprep.subr.mxu0 0.0
      %267 = vmatpush1.msra.mxu0 %v245
      %268 = vmatprep.subr.mxu0 0.0
      %269 = vmatpush1.msra.mxu0 %v246
      %270 = vmatprep.subr.mxu0 0.0
      %271 = vmatpush1.msra.mxu0 %v247
      %272 = vmatprep.subr.mxu0 0.0
      %273 = vmatpush1.msra.mxu0 %v248
      %274 = vmatprep.subr.mxu0 0.0
      %275 = vmatpush1.msra.mxu0 %v249
      %276 = vmatprep.subr.mxu0 0.0
      %277 = vmatpush1.msra.mxu0 %v250
      %278 = vmatprep.subr.mxu0 0.0
      %279 = vmatpush1.msra.mxu0 %v251
      %280 = vmatprep.subr.mxu0 0.0
      %281 = vmatpush1.msra.mxu0 %v252
      %282 = vmatprep.subr.mxu0 0.0
      %283 = vmatpush1.msra.mxu0 %v253
      %284 = vmatprep.subr.mxu0 0.0
      %285 = vmatpush1.msra.mxu0 %v254
      %286 = vmatprep.subr.mxu0 0.0
      %287 = vmatpush1.msra.mxu0 %v255
      %288 = vmatprep.subr.mxu0 0.0
      %289 = vmatpush1.msra.mxu0 0.0
      %290 = vmatprep.subr.mxu0 0.0
      %291 = vmatpush1.msra.mxu0 0.0
      %292 = vmatprep.subr.mxu0 0.0
      %293 = vmatpush1.msra.mxu0 0.0
      %294 = vmatprep.subr.mxu0 0.0
      %295 = vmatpush1.msra.mxu0 0.0
      %296 = vmatprep.subr.mxu0 0.0
      %297 = vmatpush1.msra.mxu0 0.0
      %298 = vmatprep.subr.mxu0 0.0
      %299 = vmatpush1.msra.mxu0 0.0
      %300 = vmatprep.subr.mxu0 0.0
      %301 = vmatpush1.msra.mxu0 0.0
      %302 = vmatprep.subr.mxu0 0.0
      %303 = vmatpush1.msra.mxu0 0.0
      %304 = vmatprep.subr.mxu0 0.0
      %305 = vmatpush1.msra.mxu0 0.0
      %306 = vmatprep.subr.mxu0 0.0
      %307 = vmatpush1.msra.mxu0 0.0
      %308 = vmatprep.subr.mxu0 0.0
      %309 = vmatpush1.msra.mxu0 0.0
      %310 = vmatprep.subr.mxu0 0.0
      %311 = vmatpush1.msra.mxu0 0.0
      %312 = vmatprep.subr.mxu0 0.0
      %313 = vmatpush1.msra.mxu0 0.0
      %314 = vmatprep.subr.mxu0 0.0
      %315 = vmatpush1.msra.mxu0 0.0
      %316 = vmatprep.subr.mxu0 0.0
      %317 = vmatpush1.msra.mxu0 0.0
      %318 = vmatprep.subr.mxu0 0.0
      %319 = vmatpush1.msra.mxu0 0.0
      %320 = vmatprep.mubr.f32.mxu0 0.0
      %321 = vmatmul.mubr.f32.gmra.mrb[0].mxu0 %v239
      %v322 = vpop.f32.mrb[0].mxu0
      %v323 = vadd.f32 0.0, %v322
      %v324 = vpop.f32.mrb[0].mxu0
      %325 = vdwg.mxu0
      %v326 = vlaneseq
      %v327 = vand.u32 %v326, 127
      %vm328 = vcmp.lt.s32.totalorder %v327, 32
      %v329 = vsel %vm328, %v323, 0.0
      %330 = vst [vmem:[#allocation2] sm:$0xff] %v329
      %331 = vst [vmem:[%s230] sm:$0xff] %v329
      %v332 = vld [vmem:[%s3] sm:$0xff]
      %v333 = vld [vmem:[%s3 + $0x8] sm:$0xff]
      %v334 = vld [vmem:[%s3 + $0x10] sm:$0xff]
      %v335 = vld [vmem:[%s3 + $0x18] sm:$0xff]
      %v336 = vld [vmem:[%s3 + $0x20] sm:$0xff]
      %v337 = vld [vmem:[%s3 + $0x28] sm:$0xff]
      %v338 = vld [vmem:[%s3 + $0x30] sm:$0xff]
      %v339 = vld [vmem:[%s3 + $0x38] sm:$0xff]
      %v340 = vld [vmem:[%s3 + $0x40] sm:$0xff]
      %v341 = vld [vmem:[%s3 + $0x48] sm:$0xff]
      %v342 = vld [vmem:[%s3 + $0x50] sm:$0xff]
      %v343 = vld [vmem:[%s3 + $0x58] sm:$0xff]
      %v344 = vld [vmem:[%s3 + $0x60] sm:$0xff]
      %v345 = vld [vmem:[%s3 + $0x68] sm:$0xff]
      %v346 = vld [vmem:[%s3 + $0x70] sm:$0xff]
      %v347 = vld [vmem:[%s3 + $0x78] sm:$0xff]
      %348 = vmatprep.subr.mxu0 0.0
      %349 = vmatpush1.msra.mxu0 %v332
      %350 = vmatprep.subr.mxu0 0.0
      %351 = vmatpush1.msra.mxu0 %v333
      %352 = vmatprep.subr.mxu0 0.0
      %353 = vmatpush1.msra.mxu0 %v334
      %354 = vmatprep.subr.mxu0 0.0
      %355 = vmatpush1.msra.mxu0 %v335
      %356 = vmatprep.subr.mxu0 0.0
      %357 = vmatpush1.msra.mxu0 %v336
      %358 = vmatprep.subr.mxu0 0.0
      %359 = vmatpush1.msra.mxu0 %v337
      %360 = vmatprep.subr.mxu0 0.0
      %361 = vmatpush1.msra.mxu0 %v338
      %362 = vmatprep.subr.mxu0 0.0
      %363 = vmatpush1.msra.mxu0 %v339
      %364 = vmatprep.subr.mxu0 0.0
      %365 = vmatpush1.msra.mxu0 %v340
      %366 = vmatprep.subr.mxu0 0.0
      %367 = vmatpush1.msra.mxu0 %v341
      %368 = vmatprep.subr.mxu0 0.0
      %369 = vmatpush1.msra.mxu0 %v342
      %370 = vmatprep.subr.mxu0 0.0
      %371 = vmatpush1.msra.mxu0 %v343
      %372 = vmatprep.subr.mxu0 0.0
      %373 = vmatpush1.msra.mxu0 %v344
      %374 = vmatprep.subr.mxu0 0.0
      %375 = vmatpush1.msra.mxu0 %v345
      %376 = vmatprep.subr.mxu0 0.0
      %377 = vmatpush1.msra.mxu0 %v346
      %378 = vmatprep.subr.mxu0 0.0
      %379 = vmatpush1.msra.mxu0 %v347
      %380 = vmatprep.subr.mxu0 0.0
      %381 = vmatpush1.msra.mxu0 0.0
      %382 = vmatprep.subr.mxu0 0.0
      %383 = vmatpush1.msra.mxu0 0.0
      %384 = vmatprep.subr.mxu0 0.0
      %385 = vmatpush1.msra.mxu0 0.0
      %386 = vmatprep.subr.mxu0 0.0
      %387 = vmatpush1.msra.mxu0 0.0
      %388 = vmatprep.subr.mxu0 0.0
      %389 = vmatpush1.msra.mxu0 0.0
      %390 = vmatprep.subr.mxu0 0.0
      %391 = vmatpush1.msra.mxu0 0.0
      %392 = vmatprep.subr.mxu0 0.0
      %393 = vmatpush1.msra.mxu0 0.0
      %394 = vmatprep.subr.mxu0 0.0
      %395 = vmatpush1.msra.mxu0 0.0
      %396 = vmatprep.subr.mxu0 0.0
      %397 = vmatpush1.msra.mxu0 0.0
      %398 = vmatprep.subr.mxu0 0.0
      %399 = vmatpush1.msra.mxu0 0.0
      %400 = vmatprep.subr.mxu0 0.0
      %401 = vmatpush1.msra.mxu0 0.0
      %402 = vmatprep.subr.mxu0 0.0
      %403 = vmatpush1.msra.mxu0 0.0
      %404 = vmatprep.subr.mxu0 0.0
      %405 = vmatpush1.msra.mxu0 0.0
      %406 = vmatprep.subr.mxu0 0.0
      %407 = vmatpush1.msra.mxu0 0.0
      %408 = vmatprep.subr.mxu0 0.0
      %409 = vmatpush1.msra.mxu0 0.0
      %410 = vmatprep.subr.mxu0 0.0
      %411 = vmatpush1.msra.mxu0 0.0
      %412 = vmatprep.mubr.f32.mxu0 0.0
      %413 = vmatmul.mubr.f32.gmra.mrb[0].mxu0 %v323
      %v414 = vpop.f32.mrb[0].mxu0
      %v415 = vadd.f32 0.0, %v414
      %v416 = vpop.f32.mrb[0].mxu0
      %417 = vdwg.mxu0
      %vm418 = vcmp.lt.s32.totalorder %v327, 16
      %v419 = vsel %vm418, %v415, -inf
      %420 = vmax.xlane.f32.xlu0 %v419
      %v421 = vpop.xlane.xlu0 %420
      %v422 = vsub.f32 %v419, %v421
      %v423 = vmul.f32 %v422, 1.442695
      %v424 = vpow.pop %v423
      %425 = vadd.xlane.f32.xlu0 %v424
      %v426 = vpop.xlane.xlu0 %425
      %v427 = vlog2.pop %v426
      %v428 = vmul.f32 %v427, 0.6931472
      %v429 = vsub.f32 %v422, %v428
      %430 = vst [vmem:[%s226] sm:$0xff] %v429
      %p431 = scmp.lt.s32.totalorder %s17, 7
      %s432 = scalar_select %p431, %s17, 7
      %s433 = smul.addr %s432, 8
      %s434 = scalar_lea.vmem %s4, %s433
      %p435 = scmp.lt.s32.totalorder %s17, 7
      %s436 = scalar_select %p435, %s17, 7
      %s437 = smul.addr %s436, 8
      %s438 = scalar_lea.vmem %s5, %s437
      // Predicated region
      $region41: #{rnn_sequence.1} parent=35 // pred_check
        %p439 = pneg %p124
      $region42: #{rnn_sequence.1} parent=35 // pred_check_branch
        %441 = sbr.rel (%p439) target = $region44
      $region43: #{rnn_sequence.1} parent=35 // pred_region
        _
      $region44: #{rnn_sequence.1} parent=35 // pred_fallthru
        _
      // Predicated region
      $region45: #{rnn_sequence.1} parent=35 // pred_check
        %p442 = pneg %p150
      $region46: #{rnn_sequence.1} parent=35 // pred_check_branch
        %444 = sbr.rel (%p442) target = $region48
      $region47: #{rnn_sequence.1} parent=35 // pred_region
        _
      $region48: #{rnn_sequence.1} parent=35 // pred_fallthru
        _
    $region36: #{rnn_sequence.1} parent=5 // pred_fallthru
      _
    %p445 = scmp.le.s32.totalorder 2, %s12
    // Predicated region
    $region49: #{rnn_sequence.1} parent=5 // pred_check
      %p446 = pneg %p445
    $region50: #{rnn_sequence.1} parent=5 // pred_check_branch
      %448 = sbr.rel (%p446) target = $region52
    $region51: #{rnn_sequence.1} parent=5 // pred_region
      %s449 = ssub.s32 %s12, 2
      // Predicated region
      $region53: #{rnn_sequence.1} parent=51 // pred_check
        %p450 = pneg %p130
      $region54: #{rnn_sequence.1} parent=51 // pred_check_branch
        %452 = sbr.rel (%p450) target = $region56
      $region55: #{rnn_sequence.1} parent=51 // pred_region
        %p453 = scmp.lt.s32.totalorder %s18, 7
        %s454 = scalar_select %p453, %s18, 7
        %s455 = smul.addr %s454, 8
        %s456 = scalar_lea.vmem %s4, %s455
      $region56: #{rnn_sequence.1} parent=51 // pred_fallthru
        _
      // Predicated region
      $region57: #{rnn_sequence.1} parent=51 // pred_check
        %p457 = pneg %p156
      $region58: #{rnn_sequence.1} parent=51 // pred_check_branch
        %459 = sbr.rel (%p457) target = $region60
      $region59: #{rnn_sequence.1} parent=51 // pred_region
        %p460 = scmp.lt.s32.totalorder %s18, 7
        %s461 = scalar_select %p460, %s18, 7
        %s462 = smul.addr %s461, 8
        %s463 = scalar_lea.vmem %s5, %s462
      $region60: #{rnn_sequence.1} parent=51 // pred_fallthru
        _
    $region52: #{rnn_sequence.1} parent=5 // pred_fallthru
      _
  $region6: #{rnn_sequence.1} parent=0 // loop_footer
    %s16 = sadd.s32 1, %s12
  $region7: #{rnn_sequence.1} parent=0 // loop_footer_branch
    %11 = sbr.rel target = $region3
  $region8: #{rnn_sequence.1} parent=0 // loop_exit
    _

</llo_original>
